<compile_context>
chip_gen: v7x
topology: tpu7x:2x2x1
jax: 0.10.0
libtpu: 0.0.40
codegen_flags: <defaults>
</compile_context>

<pallas_src>
import functools

import jax
import jax.numpy as jnp
from jax.experimental import pallas as pl
from jax.experimental.pallas import tpu as pltpu


def _round_up(n, m):
    return (n + m - 1) // m * m


_SQRT_HALF = 0.7071067811865476  # 1/sqrt(2)


def _gelu_f32(x, approximate):
    if approximate:
        # tanh-approx GELU -> transcendental lands on the (otherwise idle) EUP.
        return jax.nn.gelu(x, approximate=True)
    # PyTorch nn.GELU() default = exact (erf-based) GELU.
    return 0.5 * x * (1.0 + jax.lax.erf(x * jnp.float32(_SQRT_HALF)))


def phi_kernel(x_ref, w1_ref, b1_ref, w2_ref, b2_ref, w3_ref, b3_ref, o_ref,
               *, approximate_gelu):
    x = x_ref[...]  # already in the compute dtype (bf16 or f32)

    # Layer 1: Linear(input_dim -> hidden_p) + GELU   (f32 accumulate)
    h1 = jnp.dot(x, w1_ref[...], preferred_element_type=jnp.float32)
    h1 = _gelu_f32(h1 + b1_ref[...], approximate_gelu)
    # Dropout(p) -> identity at inference.

    # Layer 2: Linear(hidden_p -> hidden_p) + GELU
    h2 = jnp.dot(h1.astype(w2_ref.dtype), w2_ref[...],
                 preferred_element_type=jnp.float32)
    h2 = _gelu_f32(h2 + b2_ref[...], approximate_gelu)
    # Dropout(p) -> identity at inference.

    # Layer 3: Linear(hidden_p -> output_dim)
    out = jnp.dot(h2.astype(w3_ref.dtype), w3_ref[...],
                  preferred_element_type=jnp.float32)
    out = out + b3_ref[...]

    o_ref[...] = out.astype(o_ref.dtype)


def prepare_phi_params(w1, b1, w2, b2, w3, b3, compute_dtype=jnp.bfloat16):
    """One-time parameter prep (hoisted out of the jitted forward).

    * Weights come in (in, out) layout; hidden dim is zero-padded to a
      multiple of 128 (lane-dense MXU operands; GELU(0)=0 so padded columns
      and rows contribute nothing). The OUTPUT dim is left unpadded.
    * Weights are cast to compute_dtype (bf16 -> native MXU path with f32
      accumulation); biases stay f32 since they add into the f32 accumulator.
    """
    hidden = w1.shape[1]
    hid_p = _round_up(hidden, 128)
    dh = hid_p - hidden
    w1p = jnp.pad(w1, ((0, 0), (0, dh))).astype(compute_dtype)
    b1p = jnp.pad(b1, ((0, 0), (0, dh))).astype(jnp.float32)
    w2p = jnp.pad(w2, ((0, dh), (0, dh))).astype(compute_dtype)
    b2p = jnp.pad(b2, ((0, 0), (0, dh))).astype(jnp.float32)
    w3p = jnp.pad(w3, ((0, dh), (0, 0))).astype(compute_dtype)
    b3p = b3.astype(jnp.float32)
    return w1p, b1p, w2p, b2p, w3p, b3p


@functools.partial(jax.jit, static_argnames=("block_batch", "approximate_gelu"))
def phi_forward(x, w1p, b1p, w2p, b2p, w3p, b3p, *, block_batch=None,
                approximate_gelu=False):
    """x: (B, input_dim). Params from prepare_phi_params (padded / cast)."""
    B, in_dim = x.shape
    hid_p = w1p.shape[1]
    out_dim = w3p.shape[1]
    out_dtype = x.dtype

    # Stream activations in the weights' compute dtype (halves x HBM bytes
    # on the bf16 path).
    x = x.astype(w1p.dtype)

    # --- Batch tile: big (amortize ~0.35us per grid step), multiple of 8,
    #     >= 2 grid steps when possible so v7x's 2 TensorCores both get work.
    if block_batch is None:
        tb = min(_round_up(B, 8), 2048)
        if B > 8:
            tb = min(tb, max(8, _round_up(pl.cdiv(B, 2), 8)))
    else:
        tb = max(8, _round_up(block_batch, 8))
    tb = min(tb, _round_up(B, 8))
    grid = (pl.cdiv(B, tb),)  # last partial block is masked by Pallas; no x pad.

    # --- Rough VMEM footprint; only raise the scoped limit when needed. ---
    w_item = jnp.dtype(w1p.dtype).itemsize
    o_item = jnp.dtype(out_dtype).itemsize
    vmem_est = (
        2 * tb * in_dim * w_item                     # x (double-buffered)
        + 2 * tb * out_dim * o_item                  # out (double-buffered)
        + (in_dim + hid_p) * hid_p * w_item          # w1, w2 (resident)
        + hid_p * out_dim * w_item                   # w3 (resident)
        + 3 * tb * hid_p * 4                         # f32 h1/h2/out temporaries
    )
    cp_kwargs = dict(dimension_semantics=("parallel",))
    if vmem_est > 32 * 1024 * 1024:
        cp_kwargs["vmem_limit_bytes"] = int(min(vmem_est * 2, 60 * 1024 * 1024))

    kernel = functools.partial(phi_kernel, approximate_gelu=approximate_gelu)

    out = pl.pallas_call(
        kernel,
        out_shape=jax.ShapeDtypeStruct((B, out_dim), out_dtype),
        grid_spec=pl.GridSpec(
            grid=grid,
            in_specs=[
                # x: blocked along batch (pipelined / double-buffered).
                pl.BlockSpec((tb, in_dim), lambda i: (i, 0)),
                # Weights & biases: constant index_map -> VMEM-resident.
                pl.BlockSpec((in_dim, hid_p), lambda i: (0, 0)),
                pl.BlockSpec((1, hid_p), lambda i: (0, 0)),
                pl.BlockSpec((hid_p, hid_p), lambda i: (0, 0)),
                pl.BlockSpec((1, hid_p), lambda i: (0, 0)),
                pl.BlockSpec((hid_p, out_dim), lambda i: (0, 0)),
                pl.BlockSpec((1, out_dim), lambda i: (0, 0)),
            ],
            out_specs=pl.BlockSpec((tb, out_dim), lambda i: (i, 0)),
        ),
        compiler_params=pltpu.CompilerParams(**cp_kwargs),
    )(x, w1p, b1p, w2p, b2p, w3p, b3p)

    return out


def init_phi_params(key, input_dim, hidden_dim, output_dim, dtype=jnp.float32):
    """PyTorch-Linear-style uniform(+/- 1/sqrt(fan_in)) init.

    Weights returned in (in, out) layout (already transposed vs PyTorch).
    Biases returned as (1, out) for clean 2-D broadcasting.
    """
    def linear(k, fan_in, fan_out):
        kw, kb = jax.random.split(k)
        bound = 1.0 / jnp.sqrt(fan_in)
        w = jax.random.uniform(kw, (fan_in, fan_out), dtype, -bound, bound)
        b = jax.random.uniform(kb, (1, fan_out), dtype, -bound, bound)
        return w, b

    k1, k2, k3 = jax.random.split(key, 3)
    w1, b1 = linear(k1, input_dim, hidden_dim)
    w2, b2 = linear(k2, hidden_dim, hidden_dim)
    w3, b3 = linear(k3, hidden_dim, output_dim)
    return w1, b1, w2, b2, w3, b3


def phi_reference(x, w1, b1, w2, b2, w3, b3):
    g = lambda v: 0.5 * v * (1.0 + jax.lax.erf(v * jnp.float32(_SQRT_HALF)))
    h = g(x @ w1 + b1)
    h = g(h @ w2 + b2)
    return h @ w3 + b3


if __name__ == "__main__":
    # Small shapes consistent with the module: input=32, hidden=64, output=32.
    IN, H, OUT = 32, 64, 32

    key = jax.random.PRNGKey(0)
    kx1, kx2, kp = jax.random.split(key, 3)
    raw = init_phi_params(kp, IN, H, OUT)  # f32, (in, out) layout

    # Case 1: f32 exact path (matches PyTorch forward), batch multiple of tile.
    params_f32 = prepare_phi_params(*raw, compute_dtype=jnp.float32)
    x1 = jax.random.normal(kx1, (8, IN), jnp.float32)
    out1 = jax.block_until_ready(phi_forward(x1, *params_f32))
    ref1 = phi_reference(x1, *raw)
    assert out1.shape == (8, OUT), out1.shape
    assert jnp.allclose(out1, ref1, atol=1e-5, rtol=1e-5), \
        f"max abs err = {jnp.max(jnp.abs(out1 - ref1))}"

    # Case 2: bf16 MXU path + tanh-approx GELU, ragged batch (exercises the
    # masked final block path: no x pad, no output slice). Looser tolerance.
    params_bf16 = prepare_phi_params(*raw, compute_dtype=jnp.bfloat16)
    x2 = jax.random.normal(kx2, (13, IN), jnp.float32)
    out2 = jax.block_until_ready(
        phi_forward(x2, *params_bf16, block_batch=8, approximate_gelu=True))
    ref2 = phi_reference(x2, *raw)
    assert out2.shape == (13, OUT), out2.shape
    assert jnp.allclose(out2, ref2, atol=7.5e-2, rtol=5e-2), \
        f"max abs err = {jnp.max(jnp.abs(out2 - ref2))}"

    print("KERNEL_OK")
</pallas_src>

<mosaic_0001>
module attributes {stable_mosaic.version = 11 : i64} {
  func.func @phi_kernel(%arg0: i32, %arg1: memref<8x32xf32, #tpu.memory_space<vmem>>, %arg2: memref<32x128xf32, #tpu.memory_space<vmem>>, %arg3: memref<1x128xf32, #tpu.memory_space<vmem>>, %arg4: memref<128x128xf32, #tpu.memory_space<vmem>>, %arg5: memref<1x128xf32, #tpu.memory_space<vmem>>, %arg6: memref<128x32xf32, #tpu.memory_space<vmem>>, %arg7: memref<1x32xf32, #tpu.memory_space<vmem>>, %arg8: memref<8x32xf32, #tpu.memory_space<vmem>>) attributes {dimension_semantics = [#tpu.dimension_semantics<parallel>], iteration_bounds = array<i64: 1>, scalar_prefetch = 0 : i64, scratch_operands = 0 : i64, tpu.core_type = #tpu.core_type<tc>, window_params = [{transform_indices = @transform_0, window_bounds = array<i64: 8, 32>}, {pipeline_mode = #tpu.pipeline_mode<synchronous>, transform_indices = @transform_1, window_bounds = array<i64: 32, 128>}, {pipeline_mode = #tpu.pipeline_mode<synchronous>, transform_indices = @transform_2, window_bounds = array<i64: 1, 128>}, {pipeline_mode = #tpu.pipeline_mode<synchronous>, transform_indices = @transform_3, window_bounds = array<i64: 128, 128>}, {pipeline_mode = #tpu.pipeline_mode<synchronous>, transform_indices = @transform_4, window_bounds = array<i64: 1, 128>}, {pipeline_mode = #tpu.pipeline_mode<synchronous>, transform_indices = @transform_5, window_bounds = array<i64: 128, 32>}, {pipeline_mode = #tpu.pipeline_mode<synchronous>, transform_indices = @transform_6, window_bounds = array<i64: 1, 32>}, {transform_indices = @transform_7, window_bounds = array<i64: 8, 32>}]} {
    %c0 = arith.constant 0 : index
    %c0_0 = arith.constant 0 : index
    %0 = vector.load %arg1[%c0, %c0_0] : memref<8x32xf32, #tpu.memory_space<vmem>>, vector<8x32xf32>
    %c0_1 = arith.constant 0 : index
    %c0_2 = arith.constant 0 : index
    %1 = vector.load %arg2[%c0_1, %c0_2] : memref<32x128xf32, #tpu.memory_space<vmem>>, vector<32x128xf32>
    %cst = arith.constant dense<0.000000e+00> : vector<8x128xf32>
    %2 = tpu.matmul %0, %1, %cst {dimension_numbers = #tpu.dot_dimension_numbers<[1], [0], [0], [1], [0, 0, 1, 1], [], []>} : vector<8x32xf32>, vector<32x128xf32>, vector<8x128xf32> -> vector<8x128xf32>
    %c0_3 = arith.constant 0 : index
    %c0_4 = arith.constant 0 : index
    %3 = vector.load %arg3[%c0_3, %c0_4] : memref<1x128xf32, #tpu.memory_space<vmem>>, vector<1x128xf32>
    %4 = vector.broadcast %3 : vector<1x128xf32> to vector<8x128xf32>
    %5 = arith.addf %2, %4 : vector<8x128xf32>
    %cst_5 = arith.constant 5.000000e-01 : f32
    %6 = vector.broadcast %cst_5 : f32 to vector<8x128xf32>
    %7 = arith.mulf %6, %5 : vector<8x128xf32>
    %cst_6 = arith.constant 0.707106769 : f32
    %8 = vector.broadcast %cst_6 : f32 to vector<8x128xf32>
    %9 = arith.mulf %5, %8 : vector<8x128xf32>
    %10 = math.erf %9 : vector<8x128xf32>
    %cst_7 = arith.constant 1.000000e+00 : f32
    %11 = vector.broadcast %cst_7 : f32 to vector<8x128xf32>
    %12 = arith.addf %11, %10 : vector<8x128xf32>
    %13 = arith.mulf %7, %12 : vector<8x128xf32>
    %c0_8 = arith.constant 0 : index
    %c0_9 = arith.constant 0 : index
    %14 = vector.load %arg4[%c0_8, %c0_9] : memref<128x128xf32, #tpu.memory_space<vmem>>, vector<128x128xf32>
    %cst_10 = arith.constant dense<0.000000e+00> : vector<8x128xf32>
    %15 = tpu.matmul %13, %14, %cst_10 {dimension_numbers = #tpu.dot_dimension_numbers<[1], [0], [0], [1], [0, 0, 1, 1], [], []>} : vector<8x128xf32>, vector<128x128xf32>, vector<8x128xf32> -> vector<8x128xf32>
    %c0_11 = arith.constant 0 : index
    %c0_12 = arith.constant 0 : index
    %16 = vector.load %arg5[%c0_11, %c0_12] : memref<1x128xf32, #tpu.memory_space<vmem>>, vector<1x128xf32>
    %17 = vector.broadcast %16 : vector<1x128xf32> to vector<8x128xf32>
    %18 = arith.addf %15, %17 : vector<8x128xf32>
    %cst_13 = arith.constant 5.000000e-01 : f32
    %19 = vector.broadcast %cst_13 : f32 to vector<8x128xf32>
    %20 = arith.mulf %19, %18 : vector<8x128xf32>
    %cst_14 = arith.constant 0.707106769 : f32
    %21 = vector.broadcast %cst_14 : f32 to vector<8x128xf32>
    %22 = arith.mulf %18, %21 : vector<8x128xf32>
    %23 = math.erf %22 : vector<8x128xf32>
    %cst_15 = arith.constant 1.000000e+00 : f32
    %24 = vector.broadcast %cst_15 : f32 to vector<8x128xf32>
    %25 = arith.addf %24, %23 : vector<8x128xf32>
    %26 = arith.mulf %20, %25 : vector<8x128xf32>
    %c0_16 = arith.constant 0 : index
    %c0_17 = arith.constant 0 : index
    %27 = vector.load %arg6[%c0_16, %c0_17] : memref<128x32xf32, #tpu.memory_space<vmem>>, vector<128x32xf32>
    %cst_18 = arith.constant dense<0.000000e+00> : vector<8x32xf32>
    %28 = tpu.matmul %26, %27, %cst_18 {dimension_numbers = #tpu.dot_dimension_numbers<[1], [0], [0], [1], [0, 0, 1, 1], [], []>} : vector<8x128xf32>, vector<128x32xf32>, vector<8x32xf32> -> vector<8x32xf32>
    %c0_19 = arith.constant 0 : index
    %c0_20 = arith.constant 0 : index
    %29 = vector.load %arg7[%c0_19, %c0_20] : memref<1x32xf32, #tpu.memory_space<vmem>>, vector<1x32xf32>
    %30 = vector.broadcast %29 : vector<1x32xf32> to vector<8x32xf32>
    %31 = arith.addf %28, %30 : vector<8x32xf32>
    %c0_21 = arith.constant 0 : index
    %c0_22 = arith.constant 0 : index
    %32 = vector.load %arg8[%c0_21, %c0_22] : memref<8x32xf32, #tpu.memory_space<vmem>>, vector<8x32xf32>
    tpu.vector_store %arg8[%c0_21, %c0_22], %31 {strides = array<i32>} : memref<8x32xf32, #tpu.memory_space<vmem>>, vector<8x32xf32>,
    return
  }
  func.func @transform_0(%arg0: i32) -> (i32, i32) {
    %c0_i32 = arith.constant 0 : i32
    %c0_i32_0 = arith.constant 0 : i32
    return %arg0, %c0_i32 : i32, i32
  }
  func.func @transform_1(%arg0: i32) -> (i32, i32) {
    %c0_i32 = arith.constant 0 : i32
    %c0_i32_0 = arith.constant 0 : i32
    %c0_i32_1 = arith.constant 0 : i32
    return %c0_i32, %c0_i32_0 : i32, i32
  }
  func.func @transform_2(%arg0: i32) -> (i32, i32) {
    %c0_i32 = arith.constant 0 : i32
    %c0_i32_0 = arith.constant 0 : i32
    %c0_i32_1 = arith.constant 0 : i32
    return %c0_i32, %c0_i32_0 : i32, i32
  }
  func.func @transform_3(%arg0: i32) -> (i32, i32) {
    %c0_i32 = arith.constant 0 : i32
    %c0_i32_0 = arith.constant 0 : i32
    %c0_i32_1 = arith.constant 0 : i32
    return %c0_i32, %c0_i32_0 : i32, i32
  }
  func.func @transform_4(%arg0: i32) -> (i32, i32) {
    %c0_i32 = arith.constant 0 : i32
    %c0_i32_0 = arith.constant 0 : i32
    %c0_i32_1 = arith.constant 0 : i32
    return %c0_i32, %c0_i32_0 : i32, i32
  }
  func.func @transform_5(%arg0: i32) -> (i32, i32) {
    %c0_i32 = arith.constant 0 : i32
    %c0_i32_0 = arith.constant 0 : i32
    %c0_i32_1 = arith.constant 0 : i32
    return %c0_i32, %c0_i32_0 : i32, i32
  }
  func.func @transform_6(%arg0: i32) -> (i32, i32) {
    %c0_i32 = arith.constant 0 : i32
    %c0_i32_0 = arith.constant 0 : i32
    %c0_i32_1 = arith.constant 0 : i32
    return %c0_i32, %c0_i32_0 : i32, i32
  }
  func.func @transform_7(%arg0: i32) -> (i32, i32) {
    %c0_i32 = arith.constant 0 : i32
    %c0_i32_0 = arith.constant 0 : i32
    return %arg0, %c0_i32 : i32, i32
  }
}

</mosaic_0001>

<llo_original>
// kernel: phi_forward.1
$region0: #{phi_forward.1}
  #allocation0 [shape = 'u32[]', space=smem, size = 0x4, offset = 0x4, fixed_abs, tag = 'smem constant byte address 0x4 - core index']
  #allocation1 [shape = 'u32[144,128]{1,0:T(1,128)}', space=vmem, size = 0x12000, scoped, tag = 'internal scratch']
  %s0 = inlined_call_operand.vmem [shape: f32[8,32], index: 0, kind: input, shape index: {}]
  %s1 = inlined_call_operand.vmem [shape: f32[32,128], index: 1, kind: input, shape index: {}]
  %s2 = inlined_call_operand.vmem [shape: f32[1,128], index: 2, kind: input, shape index: {}]
  %s3 = inlined_call_operand.vmem [shape: f32[128,128], index: 3, kind: input, shape index: {}]
  %s4 = inlined_call_operand.vmem [shape: f32[1,128], index: 4, kind: input, shape index: {}]
  %s5 = inlined_call_operand.vmem [shape: f32[128,32], index: 5, kind: input, shape index: {}]
  %s6 = inlined_call_operand.vmem [shape: f32[1,32], index: 6, kind: input, shape index: {}]
  %s7 = inlined_call_operand.hbm [shape: f32[8,32], index: 7, kind: output, shape index: {}]
  %s8 = sld [smem:[#allocation0]]
  $region38: #{phi_forward.1} parent=0
    _
  %s10 = ssub.s32 1, %s8
  %s11 = scalar_select 0, %s10, %s8
  $region1: #{phi_forward.1} parent=0
    #allocation2 [shape = 'u8[4096]{0}', space=vmem, size = 0x1000, scoped, tag = 'output window, operand 0, single buffered']
    #allocation3 [shape = 's32[1]{0}', space=sflag, size = 0x4, scoped, tag = 'scoped memory for phi_forward.1']
    %12 = vsyncpa [#allocation3], 0
    // Predicated region
    $region2: #{phi_forward.1} parent=1 // pred_check
      _
    $region3: #{phi_forward.1} parent=1 // pred_check_branch
      %14 = sbr.rel (0) target = $region5
    $region4: #{phi_forward.1} parent=1 // pred_region
      _
    $region5: #{phi_forward.1} parent=1 // pred_fallthru
      _
    // Predicated region
    $region6: #{phi_forward.1} parent=1 // pred_check
      _
    $region7: #{phi_forward.1} parent=1 // pred_check_branch
      %16 = sbr.rel (0) target = $region9
    $region8: #{phi_forward.1} parent=1 // pred_region
      _
    $region9: #{phi_forward.1} parent=1 // pred_fallthru
      _
    // Predicated region
    $region10: #{phi_forward.1} parent=1 // pred_check
      _
    $region11: #{phi_forward.1} parent=1 // pred_check_branch
      %18 = sbr.rel (0) target = $region13
    $region12: #{phi_forward.1} parent=1 // pred_region
      _
    $region13: #{phi_forward.1} parent=1 // pred_fallthru
      _
    // Predicated region
    $region14: #{phi_forward.1} parent=1 // pred_check
      _
    $region15: #{phi_forward.1} parent=1 // pred_check_branch
      %20 = sbr.rel (0) target = $region17
    $region16: #{phi_forward.1} parent=1 // pred_region
      _
    $region17: #{phi_forward.1} parent=1 // pred_fallthru
      _
    // Predicated region
    $region18: #{phi_forward.1} parent=1 // pred_check
      _
    $region19: #{phi_forward.1} parent=1 // pred_check_branch
      %22 = sbr.rel (0) target = $region21
    $region20: #{phi_forward.1} parent=1 // pred_region
      _
    $region21: #{phi_forward.1} parent=1 // pred_fallthru
      _
    // Predicated region
    $region22: #{phi_forward.1} parent=1 // pred_check
      _
    $region23: #{phi_forward.1} parent=1 // pred_check_branch
      %24 = sbr.rel (0) target = $region25
    $region24: #{phi_forward.1} parent=1 // pred_region
      _
    $region25: #{phi_forward.1} parent=1 // pred_fallthru
      _
    // Predicated region
    $region26: #{phi_forward.1} parent=1 // pred_check
      _
    $region27: #{phi_forward.1} parent=1 // pred_check_branch
      %26 = sbr.rel (0) target = $region29
    $region28: #{phi_forward.1} parent=1 // pred_region
      _
    $region29: #{phi_forward.1} parent=1 // pred_fallthru
      _
    %v27 = vld [vmem:[%s0] sm:$0xff]
    %v28 = vld [vmem:[%s1] sm:$0xff]
    %v29 = vld [vmem:[%s1 + $0x8] sm:$0xff]
    %v30 = vld [vmem:[%s1 + $0x10] sm:$0xff]
    %v31 = vld [vmem:[%s1 + $0x18] sm:$0xff]
    %v32 = vld [vmem:[%s2] sm:$0x1]
    %v34 = vlaneseq
    %v35 = vshrl.u32 %v34, 7
    %v36 = vsub.s32 0, %v35
    %v37 = vrot.slane %v32, %v36
    %vm39 = vcmask 261120
    %v41 = vsel %vm39, %v27, 0
    %43 = vmatprep.subr.mxu0 0.0
    %44 = vmatpush1.msra.mxu0 %v28
    %45 = vmatprep.subr.mxu0 0.0
    %46 = vmatpush1.msra.mxu0 %v29
    %47 = vmatprep.subr.mxu0 0.0
    %48 = vmatpush1.msra.mxu0 %v30
    %49 = vmatprep.subr.mxu0 0.0
    %50 = vmatpush1.msra.mxu0 %v31
    %51 = vmatprep.subr.mxu0 0.0
    %52 = vmatpush1.msra.mxu0 0.0
    %53 = vmatprep.subr.mxu0 0.0
    %54 = vmatpush1.msra.mxu0 0.0
    %55 = vmatprep.subr.mxu0 0.0
    %56 = vmatpush1.msra.mxu0 0.0
    %57 = vmatprep.subr.mxu0 0.0
    %58 = vmatpush1.msra.mxu0 0.0
    %59 = vmatprep.subr.mxu0 0.0
    %60 = vmatpush1.msra.mxu0 0.0
    %61 = vmatprep.subr.mxu0 0.0
    %62 = vmatpush1.msra.mxu0 0.0
    %63 = vmatprep.subr.mxu0 0.0
    %64 = vmatpush1.msra.mxu0 0.0
    %65 = vmatprep.subr.mxu0 0.0
    %66 = vmatpush1.msra.mxu0 0.0
    %67 = vmatprep.subr.mxu0 0.0
    %68 = vmatpush1.msra.mxu0 0.0
    %69 = vmatprep.subr.mxu0 0.0
    %70 = vmatpush1.msra.mxu0 0.0
    %71 = vmatprep.subr.mxu0 0.0
    %72 = vmatpush1.msra.mxu0 0.0
    %73 = vmatprep.subr.mxu0 0.0
    %74 = vmatpush1.msra.mxu0 0.0
    %75 = vmatprep.subr.mxu0 0.0
    %76 = vmatpush1.msra.mxu0 0.0
    %77 = vmatprep.subr.mxu0 0.0
    %78 = vmatpush1.msra.mxu0 0.0
    %79 = vmatprep.subr.mxu0 0.0
    %80 = vmatpush1.msra.mxu0 0.0
    %81 = vmatprep.subr.mxu0 0.0
    %82 = vmatpush1.msra.mxu0 0.0
    %83 = vmatprep.subr.mxu0 0.0
    %84 = vmatpush1.msra.mxu0 0.0
    %85 = vmatprep.subr.mxu0 0.0
    %86 = vmatpush1.msra.mxu0 0.0
    %87 = vmatprep.subr.mxu0 0.0
    %88 = vmatpush1.msra.mxu0 0.0
    %89 = vmatprep.subr.mxu0 0.0
    %90 = vmatpush1.msra.mxu0 0.0
    %91 = vmatprep.subr.mxu0 0.0
    %92 = vmatpush1.msra.mxu0 0.0
    %93 = vmatprep.subr.mxu0 0.0
    %94 = vmatpush1.msra.mxu0 0.0
    %95 = vmatprep.subr.mxu0 0.0
    %96 = vmatpush1.msra.mxu0 0.0
    %97 = vmatprep.subr.mxu0 0.0
    %98 = vmatpush1.msra.mxu0 0.0
    %99 = vmatprep.subr.mxu0 0.0
    %100 = vmatpush1.msra.mxu0 0.0
    %101 = vmatprep.subr.mxu0 0.0
    %102 = vmatpush1.msra.mxu0 0.0
    %103 = vmatprep.subr.mxu0 0.0
    %104 = vmatpush1.msra.mxu0 0.0
    %105 = vmatprep.subr.mxu0 0.0
    %106 = vmatpush1.msra.mxu0 0.0
    %107 = vmatprep.mubr.f32.mxu0 0.0
    %108 = vmatmul.mubr.f32.gmra.mrb[0].mxu0 %v41
    %v109 = vpop.f32.mrb[0].mxu0
    %v110 = vadd.f32 %v37, %v109
    %v111 = vpop.f32.mrb[0].mxu0
    %112 = vdwg.mxu0
    %v113 = vmul.f32 %v110, 0.5
    %v114 = vmul.f32 %v110, 0.70710677
    %v115 = verf.f32.pop %v114
    %v116 = vadd.f32 %v115, 1.0
    %v117 = vmul.f32 %v113, %v116
    %v118 = vld [vmem:[%s3] sm:$0xff]
    %v119 = vld [vmem:[%s3 + $0x8] sm:$0xff]
    %v120 = vld [vmem:[%s3 + $0x10] sm:$0xff]
    %v121 = vld [vmem:[%s3 + $0x18] sm:$0xff]
    %v122 = vld [vmem:[%s3 + $0x20] sm:$0xff]
    %v123 = vld [vmem:[%s3 + $0x28] sm:$0xff]
    %v124 = vld [vmem:[%s3 + $0x30] sm:$0xff]
    %v125 = vld [vmem:[%s3 + $0x38] sm:$0xff]
    %v126 = vld [vmem:[%s3 + $0x40] sm:$0xff]
    %v127 = vld [vmem:[%s3 + $0x48] sm:$0xff]
    %v128 = vld [vmem:[%s3 + $0x50] sm:$0xff]
    %v129 = vld [vmem:[%s3 + $0x58] sm:$0xff]
    %v130 = vld [vmem:[%s3 + $0x60] sm:$0xff]
    %v131 = vld [vmem:[%s3 + $0x68] sm:$0xff]
    %v132 = vld [vmem:[%s3 + $0x70] sm:$0xff]
    %v133 = vld [vmem:[%s3 + $0x78] sm:$0xff]
    %v134 = vld [vmem:[%s4] sm:$0x1]
    %v136 = vlaneseq
    %v137 = vshrl.u32 %v136, 7
    %v138 = vsub.s32 0, %v137
    %v139 = vrot.slane %v134, %v138
    %141 = vmatprep.subr.mxu0 0.0
    %142 = vmatpush1.msra.mxu0 %v118
    %143 = vmatprep.subr.mxu0 0.0
    %144 = vmatpush1.msra.mxu0 %v119
    %145 = vmatprep.subr.mxu0 0.0
    %146 = vmatpush1.msra.mxu0 %v120
    %147 = vmatprep.subr.mxu0 0.0
    %148 = vmatpush1.msra.mxu0 %v121
    %149 = vmatprep.subr.mxu0 0.0
    %150 = vmatpush1.msra.mxu0 %v122
    %151 = vmatprep.subr.mxu0 0.0
    %152 = vmatpush1.msra.mxu0 %v123
    %153 = vmatprep.subr.mxu0 0.0
    %154 = vmatpush1.msra.mxu0 %v124
    %155 = vmatprep.subr.mxu0 0.0
    %156 = vmatpush1.msra.mxu0 %v125
    %157 = vmatprep.subr.mxu0 0.0
    %158 = vmatpush1.msra.mxu0 %v126
    %159 = vmatprep.subr.mxu0 0.0
    %160 = vmatpush1.msra.mxu0 %v127
    %161 = vmatprep.subr.mxu0 0.0
    %162 = vmatpush1.msra.mxu0 %v128
    %163 = vmatprep.subr.mxu0 0.0
    %164 = vmatpush1.msra.mxu0 %v129
    %165 = vmatprep.subr.mxu0 0.0
    %166 = vmatpush1.msra.mxu0 %v130
    %167 = vmatprep.subr.mxu0 0.0
    %168 = vmatpush1.msra.mxu0 %v131
    %169 = vmatprep.subr.mxu0 0.0
    %170 = vmatpush1.msra.mxu0 %v132
    %171 = vmatprep.subr.mxu0 0.0
    %172 = vmatpush1.msra.mxu0 %v133
    %173 = vmatprep.subr.mxu0 0.0
    %174 = vmatpush1.msra.mxu0 0.0
    %175 = vmatprep.subr.mxu0 0.0
    %176 = vmatpush1.msra.mxu0 0.0
    %177 = vmatprep.subr.mxu0 0.0
    %178 = vmatpush1.msra.mxu0 0.0
    %179 = vmatprep.subr.mxu0 0.0
    %180 = vmatpush1.msra.mxu0 0.0
    %181 = vmatprep.subr.mxu0 0.0
    %182 = vmatpush1.msra.mxu0 0.0
    %183 = vmatprep.subr.mxu0 0.0
    %184 = vmatpush1.msra.mxu0 0.0
    %185 = vmatprep.subr.mxu0 0.0
    %186 = vmatpush1.msra.mxu0 0.0
    %187 = vmatprep.subr.mxu0 0.0
    %188 = vmatpush1.msra.mxu0 0.0
    %189 = vmatprep.subr.mxu0 0.0
    %190 = vmatpush1.msra.mxu0 0.0
    %191 = vmatprep.subr.mxu0 0.0
    %192 = vmatpush1.msra.mxu0 0.0
    %193 = vmatprep.subr.mxu0 0.0
    %194 = vmatpush1.msra.mxu0 0.0
    %195 = vmatprep.subr.mxu0 0.0
    %196 = vmatpush1.msra.mxu0 0.0
    %197 = vmatprep.subr.mxu0 0.0
    %198 = vmatpush1.msra.mxu0 0.0
    %199 = vmatprep.subr.mxu0 0.0
    %200 = vmatpush1.msra.mxu0 0.0
    %201 = vmatprep.subr.mxu0 0.0
    %202 = vmatpush1.msra.mxu0 0.0
    %203 = vmatprep.subr.mxu0 0.0
    %204 = vmatpush1.msra.mxu0 0.0
    %205 = vmatprep.mubr.f32.mxu0 0.0
    %206 = vmatmul.mubr.f32.gmra.mrb[0].mxu0 %v117
    %v207 = vpop.f32.mrb[0].mxu0
    %v208 = vadd.f32 %v139, %v207
    %v209 = vpop.f32.mrb[0].mxu0
    %210 = vdwg.mxu0
    %v211 = vmul.f32 %v208, 0.5
    %v212 = vmul.f32 %v208, 0.70710677
    %v213 = verf.f32.pop %v212
    %v214 = vadd.f32 %v213, 1.0
    %v215 = vmul.f32 %v211, %v214
    %v216 = vld [vmem:[%s5] sm:$0xff]
    %v217 = vld [vmem:[%s5 + $0x8] sm:$0xff]
    %v218 = vld [vmem:[%s5 + $0x10] sm:$0xff]
    %v219 = vld [vmem:[%s5 + $0x18] sm:$0xff]
    %v220 = vld [vmem:[%s5 + $0x20] sm:$0xff]
    %v221 = vld [vmem:[%s5 + $0x28] sm:$0xff]
    %v222 = vld [vmem:[%s5 + $0x30] sm:$0xff]
    %v223 = vld [vmem:[%s5 + $0x38] sm:$0xff]
    %v224 = vld [vmem:[%s5 + $0x40] sm:$0xff]
    %v225 = vld [vmem:[%s5 + $0x48] sm:$0xff]
    %v226 = vld [vmem:[%s5 + $0x50] sm:$0xff]
    %v227 = vld [vmem:[%s5 + $0x58] sm:$0xff]
    %v228 = vld [vmem:[%s5 + $0x60] sm:$0xff]
    %v229 = vld [vmem:[%s5 + $0x68] sm:$0xff]
    %v230 = vld [vmem:[%s5 + $0x70] sm:$0xff]
    %v231 = vld [vmem:[%s5 + $0x78] sm:$0xff]
    %v232 = vld [vmem:[%s6] sm:$0x1]
    %v234 = vlaneseq
    %v235 = vshrl.u32 %v234, 7
    %v236 = vsub.s32 0, %v235
    %v237 = vrot.slane %v232, %v236
    %239 = vmatprep.subr.mxu0 0.0
    %240 = vmatpush1.msra.mxu0 %v216
    %241 = vmatprep.subr.mxu0 0.0
    %242 = vmatpush1.msra.mxu0 %v217
    %243 = vmatprep.subr.mxu0 0.0
    %244 = vmatpush1.msra.mxu0 %v218
    %245 = vmatprep.subr.mxu0 0.0
    %246 = vmatpush1.msra.mxu0 %v219
    %247 = vmatprep.subr.mxu0 0.0
    %248 = vmatpush1.msra.mxu0 %v220
    %249 = vmatprep.subr.mxu0 0.0
    %250 = vmatpush1.msra.mxu0 %v221
    %251 = vmatprep.subr.mxu0 0.0
    %252 = vmatpush1.msra.mxu0 %v222
    %253 = vmatprep.subr.mxu0 0.0
    %254 = vmatpush1.msra.mxu0 %v223
    %255 = vmatprep.subr.mxu0 0.0
    %256 = vmatpush1.msra.mxu0 %v224
    %257 = vmatprep.subr.mxu0 0.0
    %258 = vmatpush1.msra.mxu0 %v225
    %259 = vmatprep.subr.mxu0 0.0
    %260 = vmatpush1.msra.mxu0 %v226
    %261 = vmatprep.subr.mxu0 0.0
    %262 = vmatpush1.msra.mxu0 %v227
    %263 = vmatprep.subr.mxu0 0.0
    %264 = vmatpush1.msra.mxu0 %v228
    %265 = vmatprep.subr.mxu0 0.0
    %266 = vmatpush1.msra.mxu0 %v229
    %267 = vmatprep.subr.mxu0 0.0
    %268 = vmatpush1.msra.mxu0 %v230
    %269 = vmatprep.subr.mxu0 0.0
    %270 = vmatpush1.msra.mxu0 %v231
    %271 = vmatprep.subr.mxu0 0.0
    %272 = vmatpush1.msra.mxu0 0.0
    %273 = vmatprep.subr.mxu0 0.0
    %274 = vmatpush1.msra.mxu0 0.0
    %275 = vmatprep.subr.mxu0 0.0
    %276 = vmatpush1.msra.mxu0 0.0
    %277 = vmatprep.subr.mxu0 0.0
    %278 = vmatpush1.msra.mxu0 0.0
    %279 = vmatprep.subr.mxu0 0.0
    %280 = vmatpush1.msra.mxu0 0.0
    %281 = vmatprep.subr.mxu0 0.0
    %282 = vmatpush1.msra.mxu0 0.0
    %283 = vmatprep.subr.mxu0 0.0
    %284 = vmatpush1.msra.mxu0 0.0
    %285 = vmatprep.subr.mxu0 0.0
    %286 = vmatpush1.msra.mxu0 0.0
    %287 = vmatprep.subr.mxu0 0.0
    %288 = vmatpush1.msra.mxu0 0.0
    %289 = vmatprep.subr.mxu0 0.0
    %290 = vmatpush1.msra.mxu0 0.0
    %291 = vmatprep.subr.mxu0 0.0
    %292 = vmatpush1.msra.mxu0 0.0
    %293 = vmatprep.subr.mxu0 0.0
    %294 = vmatpush1.msra.mxu0 0.0
    %295 = vmatprep.subr.mxu0 0.0
    %296 = vmatpush1.msra.mxu0 0.0
    %297 = vmatprep.subr.mxu0 0.0
    %298 = vmatpush1.msra.mxu0 0.0
    %299 = vmatprep.subr.mxu0 0.0
    %300 = vmatpush1.msra.mxu0 0.0
    %301 = vmatprep.subr.mxu0 0.0
    %302 = vmatpush1.msra.mxu0 0.0
    %303 = vmatprep.mubr.f32.mxu0 0.0
    %304 = vmatmul.mubr.f32.gmra.mrb[0].mxu0 %v215
    %v305 = vpop.f32.mrb[0].mxu0
    %v306 = vadd.f32 %v237, %v305
    %v307 = vpop.f32.mrb[0].mxu0
    %308 = vdwg.mxu0
    %309 = vst.msk [vmem:[#allocation2] sm:$0xff] %vm39, %v306
    // Predicated region
    $region30: #{phi_forward.1} parent=1 // pred_check
      _
    $region31: #{phi_forward.1} parent=1 // pred_check_branch
      %311 = sbr.rel (0) target = $region33
    $region32: #{phi_forward.1} parent=1 // pred_region
      %s313 = ssub.s32 128, 128
      %314 = vsyncadd [#allocation3], %s313
      %s316 = sshll.u32 [#allocation2], 4
      %s317 = int_to_ptr.vmem [resolvable:$true] %s316
      %319 = dma.vmem_to_hbm [thread:$0]  %s317, 128, %s7, [#allocation3]
    $region33: #{phi_forward.1} parent=1 // pred_fallthru
      _
    // Predicated region
    $region34: #{phi_forward.1} parent=1 // pred_check
      _
    $region35: #{phi_forward.1} parent=1 // pred_check_branch
      %321 = sbr.rel (0) target = $region37
    $region36: #{phi_forward.1} parent=1 // pred_region
      %322 = dma.done [#allocation3], 128
    $region37: #{phi_forward.1} parent=1 // pred_fallthru
      _
    %323 = vsyncpa [#allocation3], 1

</llo_original>
